<compile_context>
chip_gen: v7x
topology: tpu7x:2x2x1
jax: 0.10.0
libtpu: 0.0.40
codegen_flags: <defaults>
</compile_context>

<pallas_src>
import jax
import jax.numpy as jnp
from jax.experimental import pallas as pl
from jax.experimental.pallas import tpu as pltpu

_EPS = 1e-12  # F.normalize default eps


def _l2norm_kernel(x_ref, o_ref):
    x = x_ref[...]
    xf = x.astype(jnp.float32)
    # per-row sum of squares along the lane (last) axis, accumulated in f32
    sq = jnp.sum(xf * xf, axis=-1, keepdims=True)
    # 1 / max(norm, eps)  ==  rsqrt(max(sum_sq, eps^2));  rsqrt runs on the EUP
    inv = jax.lax.rsqrt(jnp.maximum(sq, jnp.float32(_EPS * _EPS)))
    if o_ref.dtype == jnp.float32:
        o_ref[...] = xf * inv
    else:
        # keep the dominant broadcast multiply in the storage dtype
        o_ref[...] = (x * inv.astype(x.dtype)).astype(o_ref.dtype)


def _pick_row_tile(rows, hidden, itemsize,
                   vmem_budget_bytes=24 * 1024 * 1024, max_tile=2048):
    """Largest row tile whose double-buffered in+out blocks fit the budget."""
    # min sublane tile per dtype: 8 (f32), 16 (bf16/f16), 32 (int8/fp8)
    mult = max(8, 32 // max(itemsize, 1))
    # 2 pipeline buffers x (in block + out block)
    per_row_bytes = 4 * hidden * itemsize
    tile = vmem_budget_bytes // max(per_row_bytes, 1)
    tile = min(tile, max_tile)
    # no point tiling wider than the (rounded-up) number of rows
    rows_rounded = -(-rows // mult) * mult
    tile = min(tile, rows_rounded)
    tile = max(mult, (tile // mult) * mult)
    return tile


def l2norm_pallas(t, dim=-1):
    """L2-normalize `t` along `dim` (F.normalize(t, dim=dim, p=2) semantics)."""
    ndim = t.ndim
    if dim < 0:
        dim += ndim
    assert 0 <= dim < ndim, "invalid dim"

    # Kernel reduces along the last (lane) axis; move `dim` there if needed.
    moved = dim != ndim - 1
    if moved:
        t = jnp.moveaxis(t, dim, -1)

    orig_shape = t.shape
    hidden = orig_shape[-1]
    x2d = t.reshape(-1, hidden)
    rows = x2d.shape[0]

    row_tile = _pick_row_tile(rows, hidden, jnp.dtype(t.dtype).itemsize)
    grid = (pl.cdiv(rows, row_tile),)  # ragged last block is masked by Pallas

    out = pl.pallas_call(
        _l2norm_kernel,
        out_shape=jax.ShapeDtypeStruct((rows, hidden), t.dtype),
        grid_spec=pltpu.PrefetchScalarGridSpec(
            num_scalar_prefetch=0,
            grid=grid,
            in_specs=[pl.BlockSpec((row_tile, hidden), lambda i: (i, 0))],
            out_specs=pl.BlockSpec((row_tile, hidden), lambda i: (i, 0)),
        ),
        compiler_params=pltpu.CompilerParams(
            # row axis is fully parallel (megacore sharding where available)
            dimension_semantics=("parallel",),
            # raise the scoped VMEM limit so the large tiles double-buffer
            # cleanly; 48 MiB stays inside v7x's 64 MiB physical VMEM.
            vmem_limit_bytes=48 * 1024 * 1024,
        ),
    )(x2d)

    out = out.reshape(orig_shape)
    if moved:
        out = jnp.moveaxis(out, -1, dim)
    return out


if __name__ == "__main__":
    key = jax.random.PRNGKey(0)
    # small shape consistent with the module's forward: batch=2, seq=8, hidden=32
    x = jax.random.normal(key, (2, 8, 32), dtype=jnp.float32)

    y = l2norm_pallas(x, dim=-1)
    y = jax.block_until_ready(y)

    # reference check (plain JAX, F.normalize semantics)
    ref = x / jnp.maximum(
        jnp.sqrt(jnp.sum(x * x, axis=-1, keepdims=True)), _EPS
    )
    assert jnp.allclose(y, ref, atol=1e-6, rtol=1e-5), "mismatch vs reference"

    print("KERNEL_OK")
</pallas_src>

<mosaic_0001>
module attributes {stable_mosaic.version = 11 : i64} {
  func.func @_l2norm_kernel(%arg0: i32, %arg1: memref<16x32xf32, #tpu.memory_space<vmem>>, %arg2: memref<16x32xf32, #tpu.memory_space<vmem>>) attributes {dimension_semantics = [#tpu.dimension_semantics<parallel>], iteration_bounds = array<i64: 1>, scalar_prefetch = 0 : i64, scratch_operands = 0 : i64, tpu.core_type = #tpu.core_type<tc>, window_params = [{transform_indices = @transform_0, window_bounds = array<i64: 16, 32>}, {transform_indices = @transform_1, window_bounds = array<i64: 16, 32>}]} {
    %c0 = arith.constant 0 : index
    %c0_0 = arith.constant 0 : index
    %0 = vector.load %arg1[%c0, %c0_0] : memref<16x32xf32, #tpu.memory_space<vmem>>, vector<16x32xf32>
    %1 = arith.mulf %0, %0 : vector<16x32xf32>
    %cst = arith.constant dense<0.000000e+00> : vector<16xf32>
    %2 = vector.multi_reduction <add>, %1, %cst [1] : vector<16x32xf32> to vector<16xf32>
    %3 = vector.shape_cast %2 : vector<16xf32> to vector<16x1xf32>
    %cst_1 = arith.constant 1.000000e-24 : f32
    %4 = vector.broadcast %cst_1 : f32 to vector<16x1xf32>
    %5 = arith.maximumf %3, %4 : vector<16x1xf32>
    %6 = math.rsqrt %5 : vector<16x1xf32>
    %7 = vector.broadcast %6 : vector<16x1xf32> to vector<16x32xf32>
    %8 = arith.mulf %0, %7 : vector<16x32xf32>
    %c0_2 = arith.constant 0 : index
    %c0_3 = arith.constant 0 : index
    %9 = vector.load %arg2[%c0_2, %c0_3] : memref<16x32xf32, #tpu.memory_space<vmem>>, vector<16x32xf32>
    tpu.vector_store %arg2[%c0_2, %c0_3], %8 {strides = array<i32>} : memref<16x32xf32, #tpu.memory_space<vmem>>, vector<16x32xf32>,
    return
  }
  func.func @transform_0(%arg0: i32) -> (i32, i32) {
    %c0_i32 = arith.constant 0 : i32
    %c0_i32_0 = arith.constant 0 : i32
    return %arg0, %c0_i32 : i32, i32
  }
  func.func @transform_1(%arg0: i32) -> (i32, i32) {
    %c0_i32 = arith.constant 0 : i32
    %c0_i32_0 = arith.constant 0 : i32
    return %arg0, %c0_i32 : i32, i32
  }
}

</mosaic_0001>

<llo_original>
// kernel: tpu_custom_call.1
$region0: #{tpu_custom_call.1}
  #allocation0 [shape = 'u32[]', space=smem, size = 0x4, offset = 0x4, fixed_abs, tag = 'smem constant byte address 0x4 - core index']
  #allocation1 [shape = 'u32[144,128]{1,0:T(1,128)}', space=vmem, size = 0x12000, scoped, tag = 'internal scratch']
  %s0 = inlined_call_operand.hbm [shape: f32[16,32], index: 0, kind: input, shape index: {}]
  %s1 = inlined_call_operand.hbm [shape: f32[16,32], index: 1, kind: output, shape index: {}]
  %s2 = sld [smem:[#allocation0]]
  $region18: #{tpu_custom_call.1} parent=0
    _
  %s4 = ssub.s32 1, %s2
  %s5 = scalar_select 0, %s4, %s2
  $region1: #{tpu_custom_call.1} parent=0
    #allocation2 [shape = 'u8[8192]{0}', space=vmem, size = 0x2000, scoped, tag = 'input window, operand 0, single buffered']
    #allocation3 [shape = 's32[1]{0}', space=sflag, size = 0x4, scoped, tag = 'scoped memory for tpu_custom_call.1']
    #allocation4 [shape = 's32[1]{0}', space=sflag, size = 0x4, scoped, tag = 'scoped memory for tpu_custom_call.1']
    #allocation5 [shape = 'u8[8192]{0}', space=vmem, size = 0x2000, scoped, tag = 'output window, operand 0, single buffered']
    %6 = vsyncpa [#allocation3], 0
    %7 = vsyncpa [#allocation4], 0
    // Predicated region
    $region2: #{tpu_custom_call.1} parent=1 // pred_check
      _
    $region3: #{tpu_custom_call.1} parent=1 // pred_check_branch
      %9 = sbr.rel (0) target = $region5
    $region4: #{tpu_custom_call.1} parent=1 // pred_region
      %s11 = ssub.s32 256, 256
      %12 = vsyncadd [#allocation3], %s11
      %s13 = sshll.u32 [#allocation2], 4
      %s14 = int_to_ptr.vmem [resolvable:$true] %s13
      %19 = dma.hbm_to_vmem [thread:$0]  %s0, 256, %s14, [#allocation3], 128, 128, 8
    $region5: #{tpu_custom_call.1} parent=1 // pred_fallthru
      _
    // Predicated region
    $region6: #{tpu_custom_call.1} parent=1 // pred_check
      _
    $region7: #{tpu_custom_call.1} parent=1 // pred_check_branch
      %21 = sbr.rel (0) target = $region9
    $region8: #{tpu_custom_call.1} parent=1 // pred_region
      %22 = dma.done [#allocation3], 256
    $region9: #{tpu_custom_call.1} parent=1 // pred_fallthru
      _
    %v23 = vld [vmem:[#allocation2] sm:$0xff]
    %v24 = vld [vmem:[#allocation2 + $0x8] sm:$0xff]
    %v25 = vmul.f32 %v23, %v23
    %v26 = vmul.f32 %v24, %v24
    %vm27 = vcmask 261120
    %v28 = vsel %vm27, %v25, 0.0
    %29 = vadd.xlane.f32.xlu0 %v28
    %v30 = vpop.xlane.xlu0 %29
    %v31 = vsel %vm27, %v26, 0.0
    %32 = vadd.xlane.f32.xlu0 %v31
    %v33 = vpop.xlane.xlu0 %32
    %v34 = vmax.f32 %v30, 1e-24
    %v35 = vmax.f32 %v33, 1e-24
    %v36 = vrsqrt.pop %v34
    %v37 = vrsqrt.pop %v35
    %v38 = vmul.f32 %v23, %v36
    %v39 = vmul.f32 %v24, %v37
    %40 = vst.msk [vmem:[#allocation5] sm:$0xff] %vm27, %v38
    %41 = vst.msk [vmem:[#allocation5 + $0x8] sm:$0xff] %vm27, %v39
    // Predicated region
    $region10: #{tpu_custom_call.1} parent=1 // pred_check
      _
    $region11: #{tpu_custom_call.1} parent=1 // pred_check_branch
      %43 = sbr.rel (0) target = $region13
    $region12: #{tpu_custom_call.1} parent=1 // pred_region
      %s45 = ssub.s32 256, 256
      %46 = vsyncadd [#allocation4], %s45
      %s47 = sshll.u32 [#allocation5], 4
      %s48 = int_to_ptr.vmem [resolvable:$true] %s47
      %53 = dma.vmem_to_hbm [thread:$0]  %s48, 256, %s1, [#allocation4], 128, 128, 8
    $region13: #{tpu_custom_call.1} parent=1 // pred_fallthru
      _
    // Predicated region
    $region14: #{tpu_custom_call.1} parent=1 // pred_check
      _
    $region15: #{tpu_custom_call.1} parent=1 // pred_check_branch
      %55 = sbr.rel (0) target = $region17
    $region16: #{tpu_custom_call.1} parent=1 // pred_region
      %56 = dma.done [#allocation4], 256
    $region17: #{tpu_custom_call.1} parent=1 // pred_fallthru
      _
    %57 = vsyncpa [#allocation3], 1
    %58 = vsyncpa [#allocation4], 1

</llo_original>
